<compile_context>
chip_gen: v6e
topology: v6e:2x2x1
jax: 0.10.0
libtpu: 0.0.40
codegen_flags: <defaults>
</compile_context>

<pallas_src>
import functools
import math

import jax
import jax.numpy as jnp
from jax.experimental import pallas as pl
from jax.experimental.pallas import tpu as pltpu

_LANE = 128


def _wing_loss_kernel(pred_ref, targ_ref, out_ref, *, w, inv_eps, C):
    # Compute in f32; cast down on store if the I/O dtype is narrower.
    p = pred_ref[...].astype(jnp.float32)
    t = targ_ref[...].astype(jnp.float32)
    d = jnp.abs(p - t)
    log_branch = w * jnp.log(d * inv_eps + 1.0)  # matches torch.log(d/eps + 1)
    l1_branch = d - C
    out_ref[...] = jnp.where(d < w, log_branch, l1_branch).astype(out_ref.dtype)


def wing_loss(prediction, target, w=10.0, eps=2.0, block_rows=1024):
    assert prediction.shape == target.shape
    assert prediction.ndim == 1, "Wing_Loss is well-defined only for 1-D inputs"
    n = prediction.shape[0]
    dtype = prediction.dtype
    C = float(w - w * math.log(1.0 + w / eps))

    # Pad only when N is not lane-aligned (adds at most 127 elements); when N
    # is a multiple of 128 the reshape below is free and no extra HBM traffic
    # is generated.
    pad = (-n) % _LANE
    if pad:
        prediction = jnp.pad(prediction, (0, pad))
        target = jnp.pad(target, (0, pad))
    rows = (n + pad) // _LANE
    p2 = prediction.reshape(rows, _LANE)
    t2 = target.reshape(rows, _LANE)

    # Large blocks amortize per-step pipeline overhead; cap at the array size.
    # block_rows=1024 keeps double-buffered VMEM use ~3 MiB (f32), well inside
    # the 16/32/32 MiB scoped defaults on v5e/v6e/v7x.
    br = min(int(block_rows), rows)
    grid = (pl.cdiv(rows, br),)

    kernel = functools.partial(
        _wing_loss_kernel, w=float(w), inv_eps=float(1.0 / eps), C=C
    )

    out2 = pl.pallas_call(
        kernel,
        out_shape=jax.ShapeDtypeStruct((rows, _LANE), dtype),
        grid_spec=pltpu.PrefetchScalarGridSpec(
            num_scalar_prefetch=0,
            grid=grid,
            in_specs=[
                pl.BlockSpec((br, _LANE), lambda i: (i, 0)),
                pl.BlockSpec((br, _LANE), lambda i: (i, 0)),
            ],
            out_specs=pl.BlockSpec((br, _LANE), lambda i: (i, 0)),
        ),
        compiler_params=pltpu.CompilerParams(
            dimension_semantics=("parallel",)
        ),
    )(p2, t2)

    out = out2.reshape(-1)
    if pad:
        out = out[:n]
    return out


def wing_loss_ref(prediction, target, w=10.0, eps=2.0):
    C = w - w * math.log(1.0 + w / eps)
    d = jnp.abs(prediction - target)
    return jnp.where(d < w, w * jnp.log(d / eps + 1.0), d - C)


if __name__ == "__main__":
    key = jax.random.PRNGKey(0)
    k1, k2, k3, k4 = jax.random.split(key, 4)

    # Case 1: small lane-aligned input (single block, zero padding / zero
    # extra HBM round-trips).  Values spread so both branches are exercised.
    n1 = 2048
    p1 = jax.random.uniform(k1, (n1,), jnp.float32, -30.0, 30.0)
    t1 = jax.random.uniform(k2, (n1,), jnp.float32, -30.0, 30.0)
    o1 = wing_loss(p1, t1, w=10.0, eps=2.0)
    jax.block_until_ready(o1)
    r1 = wing_loss_ref(p1, t1, w=10.0, eps=2.0)
    assert o1.shape == (n1,)
    assert jnp.allclose(o1, r1, atol=1e-5, rtol=1e-5), "mismatch vs reference (case 1)"

    # Case 2: non-lane-aligned length, multi-step grid with a partial last
    # block (exercises the edge-block clipping path).
    n2 = 40000  # 40000 % 128 != 0; rows=313, block_rows=64 -> grid of 5 steps
    p2 = jax.random.uniform(k3, (n2,), jnp.float32, -30.0, 30.0)
    t2 = jax.random.uniform(k4, (n2,), jnp.float32, -30.0, 30.0)
    o2 = wing_loss(p2, t2, w=10.0, eps=2.0, block_rows=64)
    jax.block_until_ready(o2)
    r2 = wing_loss_ref(p2, t2, w=10.0, eps=2.0)
    assert o2.shape == (n2,)
    assert jnp.allclose(o2, r2, atol=1e-5, rtol=1e-5), "mismatch vs reference (case 2)"

    print("KERNEL_OK")
</pallas_src>

<mosaic_0001>
module attributes {stable_mosaic.version = 11 : i64} {
  func.func @_wing_loss_kernel(%arg0: i32, %arg1: memref<16x128xf32, #tpu.memory_space<vmem>>, %arg2: memref<16x128xf32, #tpu.memory_space<vmem>>, %arg3: memref<16x128xf32, #tpu.memory_space<vmem>>) attributes {dimension_semantics = [#tpu.dimension_semantics<parallel>], iteration_bounds = array<i64: 1>, scalar_prefetch = 0 : i64, scratch_operands = 0 : i64, tpu.core_type = #tpu.core_type<tc>, window_params = [{transform_indices = @transform_0, window_bounds = array<i64: 16, 128>}, {transform_indices = @transform_1, window_bounds = array<i64: 16, 128>}, {transform_indices = @transform_2, window_bounds = array<i64: 16, 128>}]} {
    %c0 = arith.constant 0 : index
    %c0_0 = arith.constant 0 : index
    %0 = vector.load %arg1[%c0, %c0_0] : memref<16x128xf32, #tpu.memory_space<vmem>>, vector<16x128xf32>
    %c0_1 = arith.constant 0 : index
    %c0_2 = arith.constant 0 : index
    %1 = vector.load %arg2[%c0_1, %c0_2] : memref<16x128xf32, #tpu.memory_space<vmem>>, vector<16x128xf32>
    %2 = arith.subf %0, %1 : vector<16x128xf32>
    %3 = math.absf %2 : vector<16x128xf32>
    %cst = arith.constant 5.000000e-01 : f32
    %4 = vector.broadcast %cst : f32 to vector<16x128xf32>
    %5 = arith.mulf %3, %4 : vector<16x128xf32>
    %cst_3 = arith.constant 1.000000e+00 : f32
    %6 = vector.broadcast %cst_3 : f32 to vector<16x128xf32>
    %7 = arith.addf %5, %6 : vector<16x128xf32>
    %8 = math.log %7 : vector<16x128xf32>
    %cst_4 = arith.constant 1.000000e+01 : f32
    %9 = vector.broadcast %cst_4 : f32 to vector<16x128xf32>
    %10 = arith.mulf %9, %8 : vector<16x128xf32>
    %cst_5 = arith.constant -7.9175949 : f32
    %11 = vector.broadcast %cst_5 : f32 to vector<16x128xf32>
    %12 = arith.subf %3, %11 : vector<16x128xf32>
    %cst_6 = arith.constant 1.000000e+01 : f32
    %13 = vector.broadcast %cst_6 : f32 to vector<16x128xf32>
    %14 = arith.cmpf olt, %3, %13 : vector<16x128xf32>
    %15 = arith.select %14, %10, %12 : vector<16x128xi1>, vector<16x128xf32>
    %c0_7 = arith.constant 0 : index
    %c0_8 = arith.constant 0 : index
    %16 = vector.load %arg3[%c0_7, %c0_8] : memref<16x128xf32, #tpu.memory_space<vmem>>, vector<16x128xf32>
    tpu.vector_store %arg3[%c0_7, %c0_8], %15 {strides = array<i32>} : memref<16x128xf32, #tpu.memory_space<vmem>>, vector<16x128xf32>,
    return
  }
  func.func @transform_0(%arg0: i32) -> (i32, i32) {
    %c0_i32 = arith.constant 0 : i32
    %c0_i32_0 = arith.constant 0 : i32
    return %arg0, %c0_i32 : i32, i32
  }
  func.func @transform_1(%arg0: i32) -> (i32, i32) {
    %c0_i32 = arith.constant 0 : i32
    %c0_i32_0 = arith.constant 0 : i32
    return %arg0, %c0_i32 : i32, i32
  }
  func.func @transform_2(%arg0: i32) -> (i32, i32) {
    %c0_i32 = arith.constant 0 : i32
    %c0_i32_0 = arith.constant 0 : i32
    return %arg0, %c0_i32 : i32, i32
  }
}

</mosaic_0001>

<llo_original>
// kernel: tpu_custom_call.1
$region0: #{tpu_custom_call.1}
  #allocation0 [shape = 'u32[]', space=smem, size = 0x4, offset = 0x4, fixed_abs, tag = 'smem constant byte address 0x4 - core index']
  #allocation1 [shape = 'u32[144,128]{1,0:T(1,128)}', space=vmem, size = 0x12000, scoped, tag = 'internal scratch']
  %s0 = inlined_call_operand.hbm [shape: f32[16,128], index: 0, kind: input, shape index: {}]
  %s1 = inlined_call_operand.hbm [shape: f32[16,128], index: 1, kind: input, shape index: {}]
  %s2 = inlined_call_operand.hbm [shape: f32[16,128], index: 2, kind: output, shape index: {}]
  %s3 = sld [smem:[#allocation0]]
  $region26: #{tpu_custom_call.1} parent=0
    _
  %s5 = ssub.s32 1, %s3
  %s6 = scalar_select 0, %s5, %s3
  $region1: #{tpu_custom_call.1} parent=0
    #allocation2 [shape = 'u8[8192]{0}', space=vmem, size = 0x2000, scoped, tag = 'input window, operand 0, single buffered']
    #allocation3 [shape = 's32[1]{0}', space=sflag, size = 0x4, scoped, tag = 'scoped memory for tpu_custom_call.1']
    #allocation4 [shape = 's32[1]{0}', space=sflag, size = 0x4, scoped, tag = 'scoped memory for tpu_custom_call.1']
    #allocation5 [shape = 'u8[8192]{0}', space=vmem, size = 0x2000, scoped, tag = 'input window, operand 1, single buffered']
    #allocation6 [shape = 's32[1]{0}', space=sflag, size = 0x4, scoped, tag = 'scoped memory for tpu_custom_call.1']
    #allocation7 [shape = 'u8[8192]{0}', space=vmem, size = 0x2000, scoped, tag = 'output window, operand 0, single buffered']
    %7 = vsyncpa [#allocation3], 0
    %8 = vsyncpa [#allocation6], 0
    %9 = vsyncpa [#allocation4], 0
    // Predicated region
    $region2: #{tpu_custom_call.1} parent=1 // pred_check
      _
    $region3: #{tpu_custom_call.1} parent=1 // pred_check_branch
      %11 = sbr.rel (0) target = $region5
    $region4: #{tpu_custom_call.1} parent=1 // pred_region
      %s13 = ssub.s32 256, 256
      %14 = vsyncadd [#allocation3], %s13
      %s15 = sshll.u32 [#allocation2], 4
      %s16 = int_to_ptr.vmem [resolvable:$true] %s15
      %21 = dma.hbm_to_vmem [thread:$0]  %s0, 256, %s16, [#allocation3], 128, 128, 8
    $region5: #{tpu_custom_call.1} parent=1 // pred_fallthru
      _
    // Predicated region
    $region6: #{tpu_custom_call.1} parent=1 // pred_check
      _
    $region7: #{tpu_custom_call.1} parent=1 // pred_check_branch
      %23 = sbr.rel (0) target = $region9
    $region8: #{tpu_custom_call.1} parent=1 // pred_region
      %s25 = ssub.s32 256, 256
      %26 = vsyncadd [#allocation6], %s25
      %s27 = sshll.u32 [#allocation5], 4
      %s28 = int_to_ptr.vmem [resolvable:$true] %s27
      %33 = dma.hbm_to_vmem [thread:$0]  %s1, 256, %s28, [#allocation6], 128, 128, 8
    $region9: #{tpu_custom_call.1} parent=1 // pred_fallthru
      _
    // Predicated region
    $region10: #{tpu_custom_call.1} parent=1 // pred_check
      _
    $region11: #{tpu_custom_call.1} parent=1 // pred_check_branch
      %35 = sbr.rel (0) target = $region13
    $region12: #{tpu_custom_call.1} parent=1 // pred_region
      %36 = dma.done [#allocation3], 256
    $region13: #{tpu_custom_call.1} parent=1 // pred_fallthru
      _
    // Predicated region
    $region14: #{tpu_custom_call.1} parent=1 // pred_check
      _
    $region15: #{tpu_custom_call.1} parent=1 // pred_check_branch
      %38 = sbr.rel (0) target = $region17
    $region16: #{tpu_custom_call.1} parent=1 // pred_region
      %39 = dma.done [#allocation6], 256
    $region17: #{tpu_custom_call.1} parent=1 // pred_fallthru
      _
    %v40 = vld [vmem:[#allocation2] sm:$0xff]
    %v41 = vld [vmem:[#allocation2 + $0x8] sm:$0xff]
    %v42 = vld [vmem:[#allocation5] sm:$0xff]
    %v43 = vld [vmem:[#allocation5 + $0x8] sm:$0xff]
    %v44 = vsub.f32 %v40, %v42
    %v45 = vsub.f32 %v41, %v43
    %v46 = vand.u32 2147483647, %v44
    %v47 = vand.u32 2147483647, %v45
    %v48 = vmul.f32 %v46, 0.5
    %v49 = vmul.f32 %v47, 0.5
    %v50 = vadd.f32 %v48, 1.0
    %v51 = vadd.f32 %v49, 1.0
    %v52 = vlog2.pop %v50
    %v53 = vmul.f32 %v52, 0.6931472
    %v54 = vlog2.pop %v51
    %v55 = vmul.f32 %v54, 0.6931472
    %v56 = vmul.f32 %v53, 10.0
    %v57 = vmul.f32 %v55, 10.0
    %v58 = vsub.f32 %v46, -7.917595
    %v59 = vsub.f32 %v47, -7.917595
    %vm60 = vcmp.lt.f32.partialorder %v46, 10.0
    %vm61 = vcmp.lt.f32.partialorder %v47, 10.0
    %v62 = vsel %vm60, %v56, %v58
    %v63 = vsel %vm61, %v57, %v59
    %64 = vst [vmem:[#allocation7] sm:$0xff] %v62
    %65 = vst [vmem:[#allocation7 + $0x8] sm:$0xff] %v63
    // Predicated region
    $region18: #{tpu_custom_call.1} parent=1 // pred_check
      _
    $region19: #{tpu_custom_call.1} parent=1 // pred_check_branch
      %67 = sbr.rel (0) target = $region21
    $region20: #{tpu_custom_call.1} parent=1 // pred_region
      %s69 = ssub.s32 256, 256
      %70 = vsyncadd [#allocation4], %s69
      %s71 = sshll.u32 [#allocation7], 4
      %s72 = int_to_ptr.vmem [resolvable:$true] %s71
      %77 = dma.vmem_to_hbm [thread:$0]  %s72, 256, %s2, [#allocation4], 128, 128, 8
    $region21: #{tpu_custom_call.1} parent=1 // pred_fallthru
      _
    // Predicated region
    $region22: #{tpu_custom_call.1} parent=1 // pred_check
      _
    $region23: #{tpu_custom_call.1} parent=1 // pred_check_branch
      %79 = sbr.rel (0) target = $region25
    $region24: #{tpu_custom_call.1} parent=1 // pred_region
      %80 = dma.done [#allocation4], 256
    $region25: #{tpu_custom_call.1} parent=1 // pred_fallthru
      _
    %81 = vsyncpa [#allocation3], 1
    %82 = vsyncpa [#allocation6], 1
    %83 = vsyncpa [#allocation4], 1

</llo_original>
